<compile_context>
chip_gen: v7x
topology: tpu7x:2x2x1
jax: 0.10.0
libtpu: 0.0.40
codegen_flags: <defaults>
</compile_context>

<pallas_src>
import functools
import math

import jax
import jax.numpy as jnp
from jax.experimental import pallas as pl
from jax.experimental.pallas import tpu as pltpu

LANE = 128      # lane width (last-dim alignment)
SUBLANE = 8     # sublane width (second-to-last-dim alignment, f32)


def _round_up(x, m):
    return ((x + m - 1) // m) * m


def mlp_kernel(x_ref,
               w1_ref, b1_ref,
               w2_ref, b2_ref,
               w3_ref, b3_ref,
               w4_ref, b4_ref,
               w5_ref, b5_ref,
               o_ref):
    """Fused 5-layer MLP forward for one (TN, D_in_p) batch tile.

    Weights (bf16) and biases (f32) are VMEM-resident across all grid steps.
    MXU matmuls take bf16 inputs and accumulate in f32; elementwise work
    (bias add, ReLU) is kept in f32 on the VPU.
    """
    def dot_bf16(a_f32, w_ref):
        return jnp.dot(a_f32.astype(jnp.bfloat16), w_ref[...],
                       preferred_element_type=jnp.float32)

    x = x_ref[...]                                            # f32 (TN, D_in_p)

    # fc1 (no activation — matches the reference forward)
    h = dot_bf16(x, w1_ref) + b1_ref[...]
    # relu(fc2)
    h = jnp.maximum(dot_bf16(h, w2_ref) + b2_ref[...], 0.0)
    # relu(fc3)
    h = jnp.maximum(dot_bf16(h, w3_ref) + b3_ref[...], 0.0)
    # relu(fc4)
    h = jnp.maximum(dot_bf16(h, w4_ref) + b4_ref[...], 0.0)
    # fcout (no activation)
    o_ref[...] = (dot_bf16(h, w5_ref) + b5_ref[...]).astype(o_ref.dtype)


@functools.partial(jax.jit, static_argnames=("batch_tile",))
def net_forward(x, params, *, batch_tile=512):
    """Fused MLP forward via a single Pallas kernel.

    x: (N, D_in) float32.
    params: list of 5 (weight (in, out) f32, bias (out,) f32) tuples.
    batch_tile: rows per grid step (512 is a good default on v6e/v7x; ~256
                on v5e if VMEM-constrained).
    """
    N, D_in = x.shape
    dims_in = [w.shape[0] for (w, _) in params]
    dims_out = [w.shape[1] for (w, _) in params]
    D_out = dims_out[-1]

    # ---- Pad feature dims to the 128-lane boundary.
    dims_in_p = [_round_up(d, LANE) for d in dims_in]
    dims_out_p = [_round_up(d, LANE) for d in dims_out]

    padded = []
    for (w, b), ip, op in zip(params, dims_in_p, dims_out_p):
        w_p = jnp.zeros((ip, op), jnp.bfloat16).at[
            :w.shape[0], :w.shape[1]].set(w.astype(jnp.bfloat16))
        b2 = jnp.asarray(b, jnp.float32).reshape(1, -1)
        b_p = jnp.zeros((1, op), jnp.float32).at[:, :b2.shape[1]].set(b2)
        padded.append((w_p, b_p))

    d_in_p = dims_in_p[0]
    d_out_p = dims_out_p[-1]

    # ---- Pad / tile the batch dimension.
    tn = min(batch_tile, _round_up(N, SUBLANE))
    n_pad = _round_up(N, tn)
    x_p = jnp.zeros((n_pad, d_in_p), jnp.float32).at[:N, :D_in].set(x)

    grid = (n_pad // tn,)

    # x / out stream per grid step; weights & biases stay resident (same block
    # index every iteration → loaded once, kept in VMEM).
    in_specs = [pl.BlockSpec((tn, d_in_p), lambda i: (i, 0))]
    flat_params = []
    for (w_p, b_p) in padded:
        in_specs.append(pl.BlockSpec(w_p.shape, lambda i: (0, 0)))
        in_specs.append(pl.BlockSpec(b_p.shape, lambda i: (0, 0)))
        flat_params += [w_p, b_p]
    out_spec = pl.BlockSpec((tn, d_out_p), lambda i: (i, 0))

    flops = 2 * n_pad * sum(ip * op for ip, op in zip(dims_in_p, dims_out_p))
    bytes_accessed = (
        x_p.size * 4 + n_pad * d_out_p * 4
        + sum(int(w.size) * 2 + int(b.size) * 4 for (w, b) in padded))

    y_p = pl.pallas_call(
        mlp_kernel,
        out_shape=jax.ShapeDtypeStruct((n_pad, d_out_p), jnp.float32),
        grid=grid,
        in_specs=in_specs,
        out_specs=out_spec,
        compiler_params=pltpu.CompilerParams(
            dimension_semantics=("parallel",),        # shard batch tiles across TCs
            vmem_limit_bytes=32 * 1024 * 1024,        # resident weights + double-
        ),                                            # buffered x/y tiles fit easily
        cost_estimate=pl.CostEstimate(
            flops=flops, transcendentals=0, bytes_accessed=bytes_accessed),
    )(x_p, *flat_params)

    # Slice away batch / lane padding.
    return y_p[:N, :D_out]


def xavier_uniform(key, fan_in, fan_out, dtype=jnp.float32):
    """Matches torch.nn.init.xavier_uniform_ (gain=1) on a (out, in) weight,
    returned transposed to (in, out) for x @ W."""
    bound = math.sqrt(6.0 / (fan_in + fan_out))
    w_out_in = jax.random.uniform(key, (fan_out, fan_in), dtype,
                                  minval=-bound, maxval=bound)
    return w_out_in.T  # (in, out)


def init_params(key, D_in, D_out, L1, L2, L3, L4):
    dims = [(D_in, L1), (L1, L2), (L2, L3), (L3, L4), (L4, D_out)]
    keys = jax.random.split(key, len(dims))
    params = []
    for k, (fi, fo) in zip(keys, dims):
        w = xavier_uniform(k, fi, fo)
        b = jnp.zeros((fo,), jnp.float32)  # nn.init.zeros_ on the bias
        params.append((w, b))
    return params


def reference_forward(x, params):
    """Pure-JAX reference mirroring the kernel math (bf16 matmul inputs,
    f32 accumulation), for a tight correctness check."""
    def mm(a, w):
        return jnp.dot(a.astype(jnp.bfloat16), w.astype(jnp.bfloat16),
                       preferred_element_type=jnp.float32)
    (w1, b1), (w2, b2), (w3, b3), (w4, b4), (w5, b5) = params
    h = mm(x, w1) + b1.reshape(1, -1)
    h = jnp.maximum(mm(h, w2) + b2.reshape(1, -1), 0.0)
    h = jnp.maximum(mm(h, w3) + b3.reshape(1, -1), 0.0)
    h = jnp.maximum(mm(h, w4) + b4.reshape(1, -1), 0.0)
    return mm(h, w5) + b5.reshape(1, -1)


if __name__ == "__main__":
    # Small shapes consistent with the module's constructor signature.
    N, D_in, D_out = 8, 16, 4
    L1, L2, L3, L4 = 32, 32, 32, 32

    key = jax.random.PRNGKey(0)
    kx, kp = jax.random.split(key)
    x = jax.random.normal(kx, (N, D_in), jnp.float32)
    params = init_params(kp, D_in, D_out, L1, L2, L3, L4)

    y = net_forward(x, params)
    jax.block_until_ready(y)

    y_ref = reference_forward(x, params)
    assert y.shape == (N, D_out)
    assert bool(jnp.allclose(y, y_ref, atol=1e-3, rtol=1e-3)), (
        "max abs err = %g" % float(jnp.max(jnp.abs(y - y_ref))))

    print("KERNEL_OK")
</pallas_src>

<mosaic_0001>
module attributes {stable_mosaic.version = 11 : i64} {
  func.func @mlp_kernel(%arg0: i32, %arg1: memref<8x128xf32, #tpu.memory_space<vmem>>, %arg2: memref<128x128xbf16, #tpu.memory_space<vmem>>, %arg3: memref<1x128xf32, #tpu.memory_space<vmem>>, %arg4: memref<128x128xbf16, #tpu.memory_space<vmem>>, %arg5: memref<1x128xf32, #tpu.memory_space<vmem>>, %arg6: memref<128x128xbf16, #tpu.memory_space<vmem>>, %arg7: memref<1x128xf32, #tpu.memory_space<vmem>>, %arg8: memref<128x128xbf16, #tpu.memory_space<vmem>>, %arg9: memref<1x128xf32, #tpu.memory_space<vmem>>, %arg10: memref<128x128xbf16, #tpu.memory_space<vmem>>, %arg11: memref<1x128xf32, #tpu.memory_space<vmem>>, %arg12: memref<8x128xf32, #tpu.memory_space<vmem>>) attributes {dimension_semantics = [#tpu.dimension_semantics<parallel>], iteration_bounds = array<i64: 1>, scalar_prefetch = 0 : i64, scratch_operands = 0 : i64, tpu.core_type = #tpu.core_type<tc>, window_params = [{transform_indices = @transform_0, window_bounds = array<i64: 8, 128>}, {pipeline_mode = #tpu.pipeline_mode<synchronous>, transform_indices = @transform_1, window_bounds = array<i64: 128, 128>}, {pipeline_mode = #tpu.pipeline_mode<synchronous>, transform_indices = @transform_2, window_bounds = array<i64: 1, 128>}, {pipeline_mode = #tpu.pipeline_mode<synchronous>, transform_indices = @transform_3, window_bounds = array<i64: 128, 128>}, {pipeline_mode = #tpu.pipeline_mode<synchronous>, transform_indices = @transform_4, window_bounds = array<i64: 1, 128>}, {pipeline_mode = #tpu.pipeline_mode<synchronous>, transform_indices = @transform_5, window_bounds = array<i64: 128, 128>}, {pipeline_mode = #tpu.pipeline_mode<synchronous>, transform_indices = @transform_6, window_bounds = array<i64: 1, 128>}, {pipeline_mode = #tpu.pipeline_mode<synchronous>, transform_indices = @transform_7, window_bounds = array<i64: 128, 128>}, {pipeline_mode = #tpu.pipeline_mode<synchronous>, transform_indices = @transform_8, window_bounds = array<i64: 1, 128>}, {pipeline_mode = #tpu.pipeline_mode<synchronous>, transform_indices = @transform_9, window_bounds = array<i64: 128, 128>}, {pipeline_mode = #tpu.pipeline_mode<synchronous>, transform_indices = @transform_10, window_bounds = array<i64: 1, 128>}, {transform_indices = @transform_11, window_bounds = array<i64: 8, 128>}]} {
    %c0 = arith.constant 0 : index
    %c0_0 = arith.constant 0 : index
    %0 = vector.load %arg1[%c0, %c0_0] : memref<8x128xf32, #tpu.memory_space<vmem>>, vector<8x128xf32>
    %1 = arith.truncf %0 : vector<8x128xf32> to vector<8x128xbf16>
    %c0_1 = arith.constant 0 : index
    %c0_2 = arith.constant 0 : index
    %2 = vector.load %arg2[%c0_1, %c0_2] : memref<128x128xbf16, #tpu.memory_space<vmem>>, vector<128x128xbf16>
    %cst = arith.constant dense<0.000000e+00> : vector<8x128xf32>
    %3 = tpu.matmul %1, %2, %cst {dimension_numbers = #tpu.dot_dimension_numbers<[1], [0], [0], [1], [0, 0, 1, 1], [], []>} : vector<8x128xbf16>, vector<128x128xbf16>, vector<8x128xf32> -> vector<8x128xf32>
    %c0_3 = arith.constant 0 : index
    %c0_4 = arith.constant 0 : index
    %4 = vector.load %arg3[%c0_3, %c0_4] : memref<1x128xf32, #tpu.memory_space<vmem>>, vector<1x128xf32>
    %5 = vector.broadcast %4 : vector<1x128xf32> to vector<8x128xf32>
    %6 = arith.addf %3, %5 : vector<8x128xf32>
    %7 = arith.truncf %6 : vector<8x128xf32> to vector<8x128xbf16>
    %c0_5 = arith.constant 0 : index
    %c0_6 = arith.constant 0 : index
    %8 = vector.load %arg4[%c0_5, %c0_6] : memref<128x128xbf16, #tpu.memory_space<vmem>>, vector<128x128xbf16>
    %cst_7 = arith.constant dense<0.000000e+00> : vector<8x128xf32>
    %9 = tpu.matmul %7, %8, %cst_7 {dimension_numbers = #tpu.dot_dimension_numbers<[1], [0], [0], [1], [0, 0, 1, 1], [], []>} : vector<8x128xbf16>, vector<128x128xbf16>, vector<8x128xf32> -> vector<8x128xf32>
    %c0_8 = arith.constant 0 : index
    %c0_9 = arith.constant 0 : index
    %10 = vector.load %arg5[%c0_8, %c0_9] : memref<1x128xf32, #tpu.memory_space<vmem>>, vector<1x128xf32>
    %11 = vector.broadcast %10 : vector<1x128xf32> to vector<8x128xf32>
    %12 = arith.addf %9, %11 : vector<8x128xf32>
    %cst_10 = arith.constant 0.000000e+00 : f32
    %13 = vector.broadcast %cst_10 : f32 to vector<8x128xf32>
    %14 = arith.maximumf %12, %13 : vector<8x128xf32>
    %15 = arith.truncf %14 : vector<8x128xf32> to vector<8x128xbf16>
    %c0_11 = arith.constant 0 : index
    %c0_12 = arith.constant 0 : index
    %16 = vector.load %arg6[%c0_11, %c0_12] : memref<128x128xbf16, #tpu.memory_space<vmem>>, vector<128x128xbf16>
    %cst_13 = arith.constant dense<0.000000e+00> : vector<8x128xf32>
    %17 = tpu.matmul %15, %16, %cst_13 {dimension_numbers = #tpu.dot_dimension_numbers<[1], [0], [0], [1], [0, 0, 1, 1], [], []>} : vector<8x128xbf16>, vector<128x128xbf16>, vector<8x128xf32> -> vector<8x128xf32>
    %c0_14 = arith.constant 0 : index
    %c0_15 = arith.constant 0 : index
    %18 = vector.load %arg7[%c0_14, %c0_15] : memref<1x128xf32, #tpu.memory_space<vmem>>, vector<1x128xf32>
    %19 = vector.broadcast %18 : vector<1x128xf32> to vector<8x128xf32>
    %20 = arith.addf %17, %19 : vector<8x128xf32>
    %cst_16 = arith.constant 0.000000e+00 : f32
    %21 = vector.broadcast %cst_16 : f32 to vector<8x128xf32>
    %22 = arith.maximumf %20, %21 : vector<8x128xf32>
    %23 = arith.truncf %22 : vector<8x128xf32> to vector<8x128xbf16>
    %c0_17 = arith.constant 0 : index
    %c0_18 = arith.constant 0 : index
    %24 = vector.load %arg8[%c0_17, %c0_18] : memref<128x128xbf16, #tpu.memory_space<vmem>>, vector<128x128xbf16>
    %cst_19 = arith.constant dense<0.000000e+00> : vector<8x128xf32>
    %25 = tpu.matmul %23, %24, %cst_19 {dimension_numbers = #tpu.dot_dimension_numbers<[1], [0], [0], [1], [0, 0, 1, 1], [], []>} : vector<8x128xbf16>, vector<128x128xbf16>, vector<8x128xf32> -> vector<8x128xf32>
    %c0_20 = arith.constant 0 : index
    %c0_21 = arith.constant 0 : index
    %26 = vector.load %arg9[%c0_20, %c0_21] : memref<1x128xf32, #tpu.memory_space<vmem>>, vector<1x128xf32>
    %27 = vector.broadcast %26 : vector<1x128xf32> to vector<8x128xf32>
    %28 = arith.addf %25, %27 : vector<8x128xf32>
    %cst_22 = arith.constant 0.000000e+00 : f32
    %29 = vector.broadcast %cst_22 : f32 to vector<8x128xf32>
    %30 = arith.maximumf %28, %29 : vector<8x128xf32>
    %31 = arith.truncf %30 : vector<8x128xf32> to vector<8x128xbf16>
    %c0_23 = arith.constant 0 : index
    %c0_24 = arith.constant 0 : index
    %32 = vector.load %arg10[%c0_23, %c0_24] : memref<128x128xbf16, #tpu.memory_space<vmem>>, vector<128x128xbf16>
    %cst_25 = arith.constant dense<0.000000e+00> : vector<8x128xf32>
    %33 = tpu.matmul %31, %32, %cst_25 {dimension_numbers = #tpu.dot_dimension_numbers<[1], [0], [0], [1], [0, 0, 1, 1], [], []>} : vector<8x128xbf16>, vector<128x128xbf16>, vector<8x128xf32> -> vector<8x128xf32>
    %c0_26 = arith.constant 0 : index
    %c0_27 = arith.constant 0 : index
    %34 = vector.load %arg11[%c0_26, %c0_27] : memref<1x128xf32, #tpu.memory_space<vmem>>, vector<1x128xf32>
    %35 = vector.broadcast %34 : vector<1x128xf32> to vector<8x128xf32>
    %36 = arith.addf %33, %35 : vector<8x128xf32>
    %c0_28 = arith.constant 0 : index
    %c0_29 = arith.constant 0 : index
    %37 = vector.load %arg12[%c0_28, %c0_29] : memref<8x128xf32, #tpu.memory_space<vmem>>, vector<8x128xf32>
    tpu.vector_store %arg12[%c0_28, %c0_29], %36 {strides = array<i32>} : memref<8x128xf32, #tpu.memory_space<vmem>>, vector<8x128xf32>,
    return
  }
  func.func @transform_0(%arg0: i32) -> (i32, i32) {
    %c0_i32 = arith.constant 0 : i32
    %c0_i32_0 = arith.constant 0 : i32
    return %arg0, %c0_i32 : i32, i32
  }
  func.func @transform_1(%arg0: i32) -> (i32, i32) {
    %c0_i32 = arith.constant 0 : i32
    %c0_i32_0 = arith.constant 0 : i32
    %c0_i32_1 = arith.constant 0 : i32
    return %c0_i32, %c0_i32_0 : i32, i32
  }
  func.func @transform_2(%arg0: i32) -> (i32, i32) {
    %c0_i32 = arith.constant 0 : i32
    %c0_i32_0 = arith.constant 0 : i32
    %c0_i32_1 = arith.constant 0 : i32
    return %c0_i32, %c0_i32_0 : i32, i32
  }
  func.func @transform_3(%arg0: i32) -> (i32, i32) {
    %c0_i32 = arith.constant 0 : i32
    %c0_i32_0 = arith.constant 0 : i32
    %c0_i32_1 = arith.constant 0 : i32
    return %c0_i32, %c0_i32_0 : i32, i32
  }
  func.func @transform_4(%arg0: i32) -> (i32, i32) {
    %c0_i32 = arith.constant 0 : i32
    %c0_i32_0 = arith.constant 0 : i32
    %c0_i32_1 = arith.constant 0 : i32
    return %c0_i32, %c0_i32_0 : i32, i32
  }
  func.func @transform_5(%arg0: i32) -> (i32, i32) {
    %c0_i32 = arith.constant 0 : i32
    %c0_i32_0 = arith.constant 0 : i32
    %c0_i32_1 = arith.constant 0 : i32
    return %c0_i32, %c0_i32_0 : i32, i32
  }
  func.func @transform_6(%arg0: i32) -> (i32, i32) {
    %c0_i32 = arith.constant 0 : i32
    %c0_i32_0 = arith.constant 0 : i32
    %c0_i32_1 = arith.constant 0 : i32
    return %c0_i32, %c0_i32_0 : i32, i32
  }
  func.func @transform_7(%arg0: i32) -> (i32, i32) {
    %c0_i32 = arith.constant 0 : i32
    %c0_i32_0 = arith.constant 0 : i32
    %c0_i32_1 = arith.constant 0 : i32
    return %c0_i32, %c0_i32_0 : i32, i32
  }
  func.func @transform_8(%arg0: i32) -> (i32, i32) {
    %c0_i32 = arith.constant 0 : i32
    %c0_i32_0 = arith.constant 0 : i32
    %c0_i32_1 = arith.constant 0 : i32
    return %c0_i32, %c0_i32_0 : i32, i32
  }
  func.func @transform_9(%arg0: i32) -> (i32, i32) {
    %c0_i32 = arith.constant 0 : i32
    %c0_i32_0 = arith.constant 0 : i32
    %c0_i32_1 = arith.constant 0 : i32
    return %c0_i32, %c0_i32_0 : i32, i32
  }
  func.func @transform_10(%arg0: i32) -> (i32, i32) {
    %c0_i32 = arith.constant 0 : i32
    %c0_i32_0 = arith.constant 0 : i32
    %c0_i32_1 = arith.constant 0 : i32
    return %c0_i32, %c0_i32_0 : i32, i32
  }
  func.func @transform_11(%arg0: i32) -> (i32, i32) {
    %c0_i32 = arith.constant 0 : i32
    %c0_i32_0 = arith.constant 0 : i32
    return %arg0, %c0_i32 : i32, i32
  }
}

</mosaic_0001>

<llo_original>
// kernel: net_forward.1
$region0: #{net_forward.1}
  #allocation0 [shape = 'u32[]', space=smem, size = 0x4, offset = 0x4, fixed_abs, tag = 'smem constant byte address 0x4 - core index']
  #allocation1 [shape = 'u32[144,128]{1,0:T(1,128)}', space=vmem, size = 0x12000, scoped, tag = 'internal scratch']
  %s0 = inlined_call_operand.vmem [shape: f32[8,128], index: 0, kind: input, shape index: {}]
  %s1 = inlined_call_operand.vmem [shape: bf16[128,128], index: 1, kind: input, shape index: {}]
  %s2 = inlined_call_operand.vmem [shape: f32[1,128], index: 2, kind: input, shape index: {}]
  %s3 = inlined_call_operand.vmem [shape: bf16[128,128], index: 3, kind: input, shape index: {}]
  %s4 = inlined_call_operand.vmem [shape: f32[1,128], index: 4, kind: input, shape index: {}]
  %s5 = inlined_call_operand.vmem [shape: bf16[128,128], index: 5, kind: input, shape index: {}]
  %s6 = inlined_call_operand.vmem [shape: f32[1,128], index: 6, kind: input, shape index: {}]
  %s7 = inlined_call_operand.vmem [shape: bf16[128,128], index: 7, kind: input, shape index: {}]
  %s8 = inlined_call_operand.vmem [shape: f32[1,128], index: 8, kind: input, shape index: {}]
  %s9 = inlined_call_operand.vmem [shape: bf16[128,128], index: 9, kind: input, shape index: {}]
  %s10 = inlined_call_operand.vmem [shape: f32[1,128], index: 10, kind: input, shape index: {}]
  %s11 = inlined_call_operand.vmem [shape: f32[8,128], index: 11, kind: output, shape index: {}]
  %s12 = sld [smem:[#allocation0]]
  $region54: #{net_forward.1} parent=0
    _
  %s14 = ssub.s32 1, %s12
  %s15 = scalar_select 0, %s14, %s12
  // Predicated region
  $region2: #{net_forward.1} parent=0 // pred_check
    _
  $region3: #{net_forward.1} parent=0 // pred_check_branch
    %17 = sbr.rel (0) target = $region5
  $region4: #{net_forward.1} parent=0 // pred_region
    _
  $region5: #{net_forward.1} parent=0 // pred_fallthru
    _
  // Predicated region
  $region6: #{net_forward.1} parent=0 // pred_check
    _
  $region7: #{net_forward.1} parent=0 // pred_check_branch
    %19 = sbr.rel (0) target = $region9
  $region8: #{net_forward.1} parent=0 // pred_region
    _
  $region9: #{net_forward.1} parent=0 // pred_fallthru
    _
  // Predicated region
  $region10: #{net_forward.1} parent=0 // pred_check
    _
  $region11: #{net_forward.1} parent=0 // pred_check_branch
    %21 = sbr.rel (0) target = $region13
  $region12: #{net_forward.1} parent=0 // pred_region
    _
  $region13: #{net_forward.1} parent=0 // pred_fallthru
    _
  // Predicated region
  $region14: #{net_forward.1} parent=0 // pred_check
    _
  $region15: #{net_forward.1} parent=0 // pred_check_branch
    %23 = sbr.rel (0) target = $region17
  $region16: #{net_forward.1} parent=0 // pred_region
    _
  $region17: #{net_forward.1} parent=0 // pred_fallthru
    _
  // Predicated region
  $region18: #{net_forward.1} parent=0 // pred_check
    _
  $region19: #{net_forward.1} parent=0 // pred_check_branch
    %25 = sbr.rel (0) target = $region21
  $region20: #{net_forward.1} parent=0 // pred_region
    _
  $region21: #{net_forward.1} parent=0 // pred_fallthru
    _
  // Predicated region
  $region22: #{net_forward.1} parent=0 // pred_check
    _
  $region23: #{net_forward.1} parent=0 // pred_check_branch
    %27 = sbr.rel (0) target = $region25
  $region24: #{net_forward.1} parent=0 // pred_region
    _
  $region25: #{net_forward.1} parent=0 // pred_fallthru
    _
  // Predicated region
  $region26: #{net_forward.1} parent=0 // pred_check
    _
  $region27: #{net_forward.1} parent=0 // pred_check_branch
    %29 = sbr.rel (0) target = $region29
  $region28: #{net_forward.1} parent=0 // pred_region
    _
  $region29: #{net_forward.1} parent=0 // pred_fallthru
    _
  // Predicated region
  $region30: #{net_forward.1} parent=0 // pred_check
    _
  $region31: #{net_forward.1} parent=0 // pred_check_branch
    %31 = sbr.rel (0) target = $region33
  $region32: #{net_forward.1} parent=0 // pred_region
    _
  $region33: #{net_forward.1} parent=0 // pred_fallthru
    _
  // Predicated region
  $region34: #{net_forward.1} parent=0 // pred_check
    _
  $region35: #{net_forward.1} parent=0 // pred_check_branch
    %33 = sbr.rel (0) target = $region37
  $region36: #{net_forward.1} parent=0 // pred_region
    _
  $region37: #{net_forward.1} parent=0 // pred_fallthru
    _
  // Predicated region
  $region38: #{net_forward.1} parent=0 // pred_check
    _
  $region39: #{net_forward.1} parent=0 // pred_check_branch
    %35 = sbr.rel (0) target = $region41
  $region40: #{net_forward.1} parent=0 // pred_region
    _
  $region41: #{net_forward.1} parent=0 // pred_fallthru
    _
  // Predicated region
  $region42: #{net_forward.1} parent=0 // pred_check
    _
  $region43: #{net_forward.1} parent=0 // pred_check_branch
    %37 = sbr.rel (0) target = $region45
  $region44: #{net_forward.1} parent=0 // pred_region
    _
  $region45: #{net_forward.1} parent=0 // pred_fallthru
    _
  %v39 = vld [vmem:[%s0] sm:$0xff]
  %v40 = vpack.c.bf16 %v39, %v39
  %v41 = vld [vmem:[%s1] sm:$0xf]
  %v42 = vld [vmem:[%s1 + $0x4] sm:$0xf]
  %v43 = vld [vmem:[%s1 + $0x8] sm:$0xf]
  %v44 = vld [vmem:[%s1 + $0xc] sm:$0xf]
  %v45 = vld [vmem:[%s1 + $0x10] sm:$0xf]
  %v46 = vld [vmem:[%s1 + $0x14] sm:$0xf]
  %v47 = vld [vmem:[%s1 + $0x18] sm:$0xf]
  %v48 = vld [vmem:[%s1 + $0x1c] sm:$0xf]
  %v49 = vld [vmem:[%s1 + $0x20] sm:$0xf]
  %v50 = vld [vmem:[%s1 + $0x24] sm:$0xf]
  %v51 = vld [vmem:[%s1 + $0x28] sm:$0xf]
  %v52 = vld [vmem:[%s1 + $0x2c] sm:$0xf]
  %v53 = vld [vmem:[%s1 + $0x30] sm:$0xf]
  %v54 = vld [vmem:[%s1 + $0x34] sm:$0xf]
  %v55 = vld [vmem:[%s1 + $0x38] sm:$0xf]
  %v56 = vld [vmem:[%s1 + $0x3c] sm:$0xf]
  %v57 = vld [vmem:[%s2] sm:$0x1]
  %v59 = vlaneseq
  %v60 = vshrl.u32 %v59, 7
  %v61 = vsub.s32 0, %v60
  %v62 = vrot.slane %v57, %v61
  %v80 = vunpack.c.l.b16 %v41
  %v81 = vunpack.c.l.b16 %v42
  %v82 = vunpack.c.l.b16 %v43
  %v83 = vunpack.c.l.b16 %v44
  %v84 = vunpack.c.l.b16 %v45
  %v85 = vunpack.c.l.b16 %v46
  %v86 = vunpack.c.l.b16 %v47
  %v87 = vunpack.c.l.b16 %v48
  %v88 = vunpack.c.l.b16 %v49
  %v89 = vunpack.c.l.b16 %v50
  %v90 = vunpack.c.l.b16 %v51
  %v91 = vunpack.c.l.b16 %v52
  %v92 = vunpack.c.l.b16 %v53
  %v93 = vunpack.c.l.b16 %v54
  %v94 = vunpack.c.l.b16 %v55
  %v95 = vunpack.c.l.b16 %v56
  %v96 = vpack.c.b16 %v81, %v80
  %v97 = vpack.c.b16 %v83, %v82
  %v98 = vpack.c.b16 %v85, %v84
  %v99 = vpack.c.b16 %v87, %v86
  %v100 = vpack.c.b16 %v89, %v88
  %v101 = vpack.c.b16 %v91, %v90
  %v102 = vpack.c.b16 %v93, %v92
  %v103 = vpack.c.b16 %v95, %v94
  %112 = vmatprep.subr.bf16.mxu0 0
  %113 = vmatpush1.bf16.msra.mxu0 %v96
  %114 = vmatprep.subr.bf16.mxu0 0
  %115 = vmatpush1.bf16.msra.mxu0 %v97
  %116 = vmatprep.subr.bf16.mxu0 0
  %117 = vmatpush1.bf16.msra.mxu0 %v98
  %118 = vmatprep.subr.bf16.mxu0 0
  %119 = vmatpush1.bf16.msra.mxu0 %v99
  %120 = vmatprep.subr.bf16.mxu0 0
  %121 = vmatpush1.bf16.msra.mxu0 %v100
  %122 = vmatprep.subr.bf16.mxu0 0
  %123 = vmatpush1.bf16.msra.mxu0 %v101
  %124 = vmatprep.subr.bf16.mxu0 0
  %125 = vmatpush1.bf16.msra.mxu0 %v102
  %126 = vmatprep.subr.bf16.mxu0 0
  %127 = vmatpush1.bf16.msra.mxu0 %v103
  %128 = vmatprep.subr.bf16.mxu0 0
  %129 = vmatpush1.bf16.msra.mxu0 0
  %130 = vmatprep.subr.bf16.mxu0 0
  %131 = vmatpush1.bf16.msra.mxu0 0
  %132 = vmatprep.subr.bf16.mxu0 0
  %133 = vmatpush1.bf16.msra.mxu0 0
  %134 = vmatprep.subr.bf16.mxu0 0
  %135 = vmatpush1.bf16.msra.mxu0 0
  %136 = vmatprep.subr.bf16.mxu0 0
  %137 = vmatpush1.bf16.msra.mxu0 0
  %138 = vmatprep.subr.bf16.mxu0 0
  %139 = vmatpush1.bf16.msra.mxu0 0
  %140 = vmatprep.subr.bf16.mxu0 0
  %141 = vmatpush1.bf16.msra.mxu0 0
  %142 = vmatprep.subr.bf16.mxu0 0
  %143 = vmatpush1.bf16.msra.mxu0 0
  %144 = vmatprep.mubr.bf16.mxu0 0
  %145 = vmatmul.mubr.bf16.gmra.mrb[0].mxu0 %v40
  %v146 = vpop.f32.mrb[0].mxu0
  %v147 = vadd.f32 %v62, %v146
  %v148 = vpop.f32.mrb[0].mxu0
  %v149 = vpop.f32.mrb[0].mxu0
  %v150 = vpop.f32.mrb[0].mxu0
  %151 = vdwg.mxu0
  %v152 = vpack.c.bf16 %v147, %v147
  %v153 = vld [vmem:[%s3] sm:$0xf]
  %v154 = vld [vmem:[%s3 + $0x4] sm:$0xf]
  %v155 = vld [vmem:[%s3 + $0x8] sm:$0xf]
  %v156 = vld [vmem:[%s3 + $0xc] sm:$0xf]
  %v157 = vld [vmem:[%s3 + $0x10] sm:$0xf]
  %v158 = vld [vmem:[%s3 + $0x14] sm:$0xf]
  %v159 = vld [vmem:[%s3 + $0x18] sm:$0xf]
  %v160 = vld [vmem:[%s3 + $0x1c] sm:$0xf]
  %v161 = vld [vmem:[%s3 + $0x20] sm:$0xf]
  %v162 = vld [vmem:[%s3 + $0x24] sm:$0xf]
  %v163 = vld [vmem:[%s3 + $0x28] sm:$0xf]
  %v164 = vld [vmem:[%s3 + $0x2c] sm:$0xf]
  %v165 = vld [vmem:[%s3 + $0x30] sm:$0xf]
  %v166 = vld [vmem:[%s3 + $0x34] sm:$0xf]
  %v167 = vld [vmem:[%s3 + $0x38] sm:$0xf]
  %v168 = vld [vmem:[%s3 + $0x3c] sm:$0xf]
  %v169 = vld [vmem:[%s4] sm:$0x1]
  %v171 = vlaneseq
  %v172 = vshrl.u32 %v171, 7
  %v173 = vsub.s32 0, %v172
  %v174 = vrot.slane %v169, %v173
  %v192 = vunpack.c.l.b16 %v153
  %v193 = vunpack.c.l.b16 %v154
  %v194 = vunpack.c.l.b16 %v155
  %v195 = vunpack.c.l.b16 %v156
  %v196 = vunpack.c.l.b16 %v157
  %v197 = vunpack.c.l.b16 %v158
  %v198 = vunpack.c.l.b16 %v159
  %v199 = vunpack.c.l.b16 %v160
  %v200 = vunpack.c.l.b16 %v161
  %v201 = vunpack.c.l.b16 %v162
  %v202 = vunpack.c.l.b16 %v163
  %v203 = vunpack.c.l.b16 %v164
  %v204 = vunpack.c.l.b16 %v165
  %v205 = vunpack.c.l.b16 %v166
  %v206 = vunpack.c.l.b16 %v167
  %v207 = vunpack.c.l.b16 %v168
  %v208 = vpack.c.b16 %v193, %v192
  %v209 = vpack.c.b16 %v195, %v194
  %v210 = vpack.c.b16 %v197, %v196
  %v211 = vpack.c.b16 %v199, %v198
  %v212 = vpack.c.b16 %v201, %v200
  %v213 = vpack.c.b16 %v203, %v202
  %v214 = vpack.c.b16 %v205, %v204
  %v215 = vpack.c.b16 %v207, %v206
  %224 = vmatprep.subr.bf16.mxu0 0
  %225 = vmatpush1.bf16.msra.mxu0 %v208
  %226 = vmatprep.subr.bf16.mxu0 0
  %227 = vmatpush1.bf16.msra.mxu0 %v209
  %228 = vmatprep.subr.bf16.mxu0 0
  %229 = vmatpush1.bf16.msra.mxu0 %v210
  %230 = vmatprep.subr.bf16.mxu0 0
  %231 = vmatpush1.bf16.msra.mxu0 %v211
  %232 = vmatprep.subr.bf16.mxu0 0
  %233 = vmatpush1.bf16.msra.mxu0 %v212
  %234 = vmatprep.subr.bf16.mxu0 0
  %235 = vmatpush1.bf16.msra.mxu0 %v213
  %236 = vmatprep.subr.bf16.mxu0 0
  %237 = vmatpush1.bf16.msra.mxu0 %v214
  %238 = vmatprep.subr.bf16.mxu0 0
  %239 = vmatpush1.bf16.msra.mxu0 %v215
  %240 = vmatprep.subr.bf16.mxu0 0
  %241 = vmatpush1.bf16.msra.mxu0 0
  %242 = vmatprep.subr.bf16.mxu0 0
  %243 = vmatpush1.bf16.msra.mxu0 0
  %244 = vmatprep.subr.bf16.mxu0 0
  %245 = vmatpush1.bf16.msra.mxu0 0
  %246 = vmatprep.subr.bf16.mxu0 0
  %247 = vmatpush1.bf16.msra.mxu0 0
  %248 = vmatprep.subr.bf16.mxu0 0
  %249 = vmatpush1.bf16.msra.mxu0 0
  %250 = vmatprep.subr.bf16.mxu0 0
  %251 = vmatpush1.bf16.msra.mxu0 0
  %252 = vmatprep.subr.bf16.mxu0 0
  %253 = vmatpush1.bf16.msra.mxu0 0
  %254 = vmatprep.subr.bf16.mxu0 0
  %255 = vmatpush1.bf16.msra.mxu0 0
  %256 = vmatprep.mubr.bf16.mxu0 0
  %257 = vmatmul.mubr.bf16.gmra.mrb[0].mxu0 %v152
  %v258 = vpop.f32.mrb[0].mxu0
  %v259 = vadd.f32 %v174, %v258
  %v260 = vpop.f32.mrb[0].mxu0
  %v261 = vpop.f32.mrb[0].mxu0
  %v262 = vpop.f32.mrb[0].mxu0
  %263 = vdwg.mxu0
  %v264 = vmax.f32 %v259, 0.0
  %v265 = vpack.c.bf16 %v264, %v264
  %v266 = vld [vmem:[%s5] sm:$0xf]
  %v267 = vld [vmem:[%s5 + $0x4] sm:$0xf]
  %v268 = vld [vmem:[%s5 + $0x8] sm:$0xf]
  %v269 = vld [vmem:[%s5 + $0xc] sm:$0xf]
  %v270 = vld [vmem:[%s5 + $0x10] sm:$0xf]
  %v271 = vld [vmem:[%s5 + $0x14] sm:$0xf]
  %v272 = vld [vmem:[%s5 + $0x18] sm:$0xf]
  %v273 = vld [vmem:[%s5 + $0x1c] sm:$0xf]
  %v274 = vld [vmem:[%s5 + $0x20] sm:$0xf]
  %v275 = vld [vmem:[%s5 + $0x24] sm:$0xf]
  %v276 = vld [vmem:[%s5 + $0x28] sm:$0xf]
  %v277 = vld [vmem:[%s5 + $0x2c] sm:$0xf]
  %v278 = vld [vmem:[%s5 + $0x30] sm:$0xf]
  %v279 = vld [vmem:[%s5 + $0x34] sm:$0xf]
  %v280 = vld [vmem:[%s5 + $0x38] sm:$0xf]
  %v281 = vld [vmem:[%s5 + $0x3c] sm:$0xf]
  %v282 = vld [vmem:[%s6] sm:$0x1]
  %v284 = vlaneseq
  %v285 = vshrl.u32 %v284, 7
  %v286 = vsub.s32 0, %v285
  %v287 = vrot.slane %v282, %v286
  %v305 = vunpack.c.l.b16 %v266
  %v306 = vunpack.c.l.b16 %v267
  %v307 = vunpack.c.l.b16 %v268
  %v308 = vunpack.c.l.b16 %v269
  %v309 = vunpack.c.l.b16 %v270
  %v310 = vunpack.c.l.b16 %v271
  %v311 = vunpack.c.l.b16 %v272
  %v312 = vunpack.c.l.b16 %v273
  %v313 = vunpack.c.l.b16 %v274
  %v314 = vunpack.c.l.b16 %v275
  %v315 = vunpack.c.l.b16 %v276
  %v316 = vunpack.c.l.b16 %v277
  %v317 = vunpack.c.l.b16 %v278
  %v318 = vunpack.c.l.b16 %v279
  %v319 = vunpack.c.l.b16 %v280
  %v320 = vunpack.c.l.b16 %v281
  %v321 = vpack.c.b16 %v306, %v305
  %v322 = vpack.c.b16 %v308, %v307
  %v323 = vpack.c.b16 %v310, %v309
  %v324 = vpack.c.b16 %v312, %v311
  %v325 = vpack.c.b16 %v314, %v313
  %v326 = vpack.c.b16 %v316, %v315
  %v327 = vpack.c.b16 %v318, %v317
  %v328 = vpack.c.b16 %v320, %v319
  %337 = vmatprep.subr.bf16.mxu0 0
  %338 = vmatpush1.bf16.msra.mxu0 %v321
  %339 = vmatprep.subr.bf16.mxu0 0
  %340 = vmatpush1.bf16.msra.mxu0 %v322
  %341 = vmatprep.subr.bf16.mxu0 0
  %342 = vmatpush1.bf16.msra.mxu0 %v323
  %343 = vmatprep.subr.bf16.mxu0 0
  %344 = vmatpush1.bf16.msra.mxu0 %v324
  %345 = vmatprep.subr.bf16.mxu0 0
  %346 = vmatpush1.bf16.msra.mxu0 %v325
  %347 = vmatprep.subr.bf16.mxu0 0
  %348 = vmatpush1.bf16.msra.mxu0 %v326
  %349 = vmatprep.subr.bf16.mxu0 0
  %350 = vmatpush1.bf16.msra.mxu0 %v327
  %351 = vmatprep.subr.bf16.mxu0 0
  %352 = vmatpush1.bf16.msra.mxu0 %v328
  %353 = vmatprep.subr.bf16.mxu0 0
  %354 = vmatpush1.bf16.msra.mxu0 0
  %355 = vmatprep.subr.bf16.mxu0 0
  %356 = vmatpush1.bf16.msra.mxu0 0
  %357 = vmatprep.subr.bf16.mxu0 0
  %358 = vmatpush1.bf16.msra.mxu0 0
  %359 = vmatprep.subr.bf16.mxu0 0
  %360 = vmatpush1.bf16.msra.mxu0 0
  %361 = vmatprep.subr.bf16.mxu0 0
  %362 = vmatpush1.bf16.msra.mxu0 0
  %363 = vmatprep.subr.bf16.mxu0 0
  %364 = vmatpush1.bf16.msra.mxu0 0
  %365 = vmatprep.subr.bf16.mxu0 0
  %366 = vmatpush1.bf16.msra.mxu0 0
  %367 = vmatprep.subr.bf16.mxu0 0
  %368 = vmatpush1.bf16.msra.mxu0 0
  %369 = vmatprep.mubr.bf16.mxu0 0
  %370 = vmatmul.mubr.bf16.gmra.mrb[0].mxu0 %v265
  %v371 = vpop.f32.mrb[0].mxu0
  %v372 = vadd.f32 %v287, %v371
  %v373 = vpop.f32.mrb[0].mxu0
  %v374 = vpop.f32.mrb[0].mxu0
  %v375 = vpop.f32.mrb[0].mxu0
  %376 = vdwg.mxu0
  %v377 = vmax.f32 %v372, 0.0
  %v378 = vpack.c.bf16 %v377, %v377
  %v379 = vld [vmem:[%s7] sm:$0xf]
  %v380 = vld [vmem:[%s7 + $0x4] sm:$0xf]
  %v381 = vld [vmem:[%s7 + $0x8] sm:$0xf]
  %v382 = vld [vmem:[%s7 + $0xc] sm:$0xf]
  %v383 = vld [vmem:[%s7 + $0x10] sm:$0xf]
  %v384 = vld [vmem:[%s7 + $0x14] sm:$0xf]
  %v385 = vld [vmem:[%s7 + $0x18] sm:$0xf]
  %v386 = vld [vmem:[%s7 + $0x1c] sm:$0xf]
  %v387 = vld [vmem:[%s7 + $0x20] sm:$0xf]
  %v388 = vld [vmem:[%s7 + $0x24] sm:$0xf]
  %v389 = vld [vmem:[%s7 + $0x28] sm:$0xf]
  %v390 = vld [vmem:[%s7 + $0x2c] sm:$0xf]
  %v391 = vld [vmem:[%s7 + $0x30] sm:$0xf]
  %v392 = vld [vmem:[%s7 + $0x34] sm:$0xf]
  %v393 = vld [vmem:[%s7 + $0x38] sm:$0xf]
  %v394 = vld [vmem:[%s7 + $0x3c] sm:$0xf]
  %v395 = vld [vmem:[%s8] sm:$0x1]
  %v397 = vlaneseq
  %v398 = vshrl.u32 %v397, 7
  %v399 = vsub.s32 0, %v398
  %v400 = vrot.slane %v395, %v399
  %v418 = vunpack.c.l.b16 %v379
  %v419 = vunpack.c.l.b16 %v380
  %v420 = vunpack.c.l.b16 %v381
  %v421 = vunpack.c.l.b16 %v382
  %v422 = vunpack.c.l.b16 %v383
  %v423 = vunpack.c.l.b16 %v384
  %v424 = vunpack.c.l.b16 %v385
  %v425 = vunpack.c.l.b16 %v386
  %v426 = vunpack.c.l.b16 %v387
  %v427 = vunpack.c.l.b16 %v388
  %v428 = vunpack.c.l.b16 %v389
  %v429 = vunpack.c.l.b16 %v390
  %v430 = vunpack.c.l.b16 %v391
  %v431 = vunpack.c.l.b16 %v392
  %v432 = vunpack.c.l.b16 %v393
  %v433 = vunpack.c.l.b16 %v394
  %v434 = vpack.c.b16 %v419, %v418
  %v435 = vpack.c.b16 %v421, %v420
  %v436 = vpack.c.b16 %v423, %v422
  %v437 = vpack.c.b16 %v425, %v424
  %v438 = vpack.c.b16 %v427, %v426
  %v439 = vpack.c.b16 %v429, %v428
  %v440 = vpack.c.b16 %v431, %v430
  %v441 = vpack.c.b16 %v433, %v432
  %450 = vmatprep.subr.bf16.mxu0 0
  %451 = vmatpush1.bf16.msra.mxu0 %v434
  %452 = vmatprep.subr.bf16.mxu0 0
  %453 = vmatpush1.bf16.msra.mxu0 %v435
  %454 = vmatprep.subr.bf16.mxu0 0
  %455 = vmatpush1.bf16.msra.mxu0 %v436
  %456 = vmatprep.subr.bf16.mxu0 0
  %457 = vmatpush1.bf16.msra.mxu0 %v437
  %458 = vmatprep.subr.bf16.mxu0 0
  %459 = vmatpush1.bf16.msra.mxu0 %v438
  %460 = vmatprep.subr.bf16.mxu0 0
  %461 = vmatpush1.bf16.msra.mxu0 %v439
  %462 = vmatprep.subr.bf16.mxu0 0
  %463 = vmatpush1.bf16.msra.mxu0 %v440
  %464 = vmatprep.subr.bf16.mxu0 0
  %465 = vmatpush1.bf16.msra.mxu0 %v441
  %466 = vmatprep.subr.bf16.mxu0 0
  %467 = vmatpush1.bf16.msra.mxu0 0
  %468 = vmatprep.subr.bf16.mxu0 0
  %469 = vmatpush1.bf16.msra.mxu0 0
  %470 = vmatprep.subr.bf16.mxu0 0
  %471 = vmatpush1.bf16.msra.mxu0 0
  %472 = vmatprep.subr.bf16.mxu0 0
  %473 = vmatpush1.bf16.msra.mxu0 0
  %474 = vmatprep.subr.bf16.mxu0 0
  %475 = vmatpush1.bf16.msra.mxu0 0
  %476 = vmatprep.subr.bf16.mxu0 0
  %477 = vmatpush1.bf16.msra.mxu0 0
  %478 = vmatprep.subr.bf16.mxu0 0
  %479 = vmatpush1.bf16.msra.mxu0 0
  %480 = vmatprep.subr.bf16.mxu0 0
  %481 = vmatpush1.bf16.msra.mxu0 0
  %482 = vmatprep.mubr.bf16.mxu0 0
  %483 = vmatmul.mubr.bf16.gmra.mrb[0].mxu0 %v378
  %v484 = vpop.f32.mrb[0].mxu0
  %v485 = vadd.f32 %v400, %v484
  %v486 = vpop.f32.mrb[0].mxu0
  %v487 = vpop.f32.mrb[0].mxu0
  %v488 = vpop.f32.mrb[0].mxu0
  %489 = vdwg.mxu0
  %v490 = vmax.f32 %v485, 0.0
  %v491 = vpack.c.bf16 %v490, %v490
  %v492 = vld [vmem:[%s9] sm:$0xf]
  %v493 = vld [vmem:[%s9 + $0x4] sm:$0xf]
  %v494 = vld [vmem:[%s9 + $0x8] sm:$0xf]
  %v495 = vld [vmem:[%s9 + $0xc] sm:$0xf]
  %v496 = vld [vmem:[%s9 + $0x10] sm:$0xf]
  %v497 = vld [vmem:[%s9 + $0x14] sm:$0xf]
  %v498 = vld [vmem:[%s9 + $0x18] sm:$0xf]
  %v499 = vld [vmem:[%s9 + $0x1c] sm:$0xf]
  %v500 = vld [vmem:[%s9 + $0x20] sm:$0xf]
  %v501 = vld [vmem:[%s9 + $0x24] sm:$0xf]
  %v502 = vld [vmem:[%s9 + $0x28] sm:$0xf]
  %v503 = vld [vmem:[%s9 + $0x2c] sm:$0xf]
  %v504 = vld [vmem:[%s9 + $0x30] sm:$0xf]
  %v505 = vld [vmem:[%s9 + $0x34] sm:$0xf]
  %v506 = vld [vmem:[%s9 + $0x38] sm:$0xf]
  %v507 = vld [vmem:[%s9 + $0x3c] sm:$0xf]
  %v508 = vld [vmem:[%s10] sm:$0x1]
  %v510 = vlaneseq
  %v511 = vshrl.u32 %v510, 7
  %v512 = vsub.s32 0, %v511
  %v513 = vrot.slane %v508, %v512
  %v531 = vunpack.c.l.b16 %v492
  %v532 = vunpack.c.l.b16 %v493
  %v533 = vunpack.c.l.b16 %v494
  %v534 = vunpack.c.l.b16 %v495
  %v535 = vunpack.c.l.b16 %v496
  %v536 = vunpack.c.l.b16 %v497
  %v537 = vunpack.c.l.b16 %v498
  %v538 = vunpack.c.l.b16 %v499
  %v539 = vunpack.c.l.b16 %v500
  %v540 = vunpack.c.l.b16 %v501
  %v541 = vunpack.c.l.b16 %v502
  %v542 = vunpack.c.l.b16 %v503
  %v543 = vunpack.c.l.b16 %v504
  %v544 = vunpack.c.l.b16 %v505
  %v545 = vunpack.c.l.b16 %v506
  %v546 = vunpack.c.l.b16 %v507
  %v547 = vpack.c.b16 %v532, %v531
  %v548 = vpack.c.b16 %v534, %v533
  %v549 = vpack.c.b16 %v536, %v535
  %v550 = vpack.c.b16 %v538, %v537
  %v551 = vpack.c.b16 %v540, %v539
  %v552 = vpack.c.b16 %v542, %v541
  %v553 = vpack.c.b16 %v544, %v543
  %v554 = vpack.c.b16 %v546, %v545
  %563 = vmatprep.subr.bf16.mxu0 0
  %564 = vmatpush1.bf16.msra.mxu0 %v547
  %565 = vmatprep.subr.bf16.mxu0 0
  %566 = vmatpush1.bf16.msra.mxu0 %v548
  %567 = vmatprep.subr.bf16.mxu0 0
  %568 = vmatpush1.bf16.msra.mxu0 %v549
  %569 = vmatprep.subr.bf16.mxu0 0
  %570 = vmatpush1.bf16.msra.mxu0 %v550
  %571 = vmatprep.subr.bf16.mxu0 0
  %572 = vmatpush1.bf16.msra.mxu0 %v551
  %573 = vmatprep.subr.bf16.mxu0 0
  %574 = vmatpush1.bf16.msra.mxu0 %v552
  %575 = vmatprep.subr.bf16.mxu0 0
  %576 = vmatpush1.bf16.msra.mxu0 %v553
  %577 = vmatprep.subr.bf16.mxu0 0
  %578 = vmatpush1.bf16.msra.mxu0 %v554
  %579 = vmatprep.subr.bf16.mxu0 0
  %580 = vmatpush1.bf16.msra.mxu0 0
  %581 = vmatprep.subr.bf16.mxu0 0
  %582 = vmatpush1.bf16.msra.mxu0 0
  %583 = vmatprep.subr.bf16.mxu0 0
  %584 = vmatpush1.bf16.msra.mxu0 0
  %585 = vmatprep.subr.bf16.mxu0 0
  %586 = vmatpush1.bf16.msra.mxu0 0
  %587 = vmatprep.subr.bf16.mxu0 0
  %588 = vmatpush1.bf16.msra.mxu0 0
  %589 = vmatprep.subr.bf16.mxu0 0
  %590 = vmatpush1.bf16.msra.mxu0 0
  %591 = vmatprep.subr.bf16.mxu0 0
  %592 = vmatpush1.bf16.msra.mxu0 0
  %593 = vmatprep.subr.bf16.mxu0 0
  %594 = vmatpush1.bf16.msra.mxu0 0
  %595 = vmatprep.mubr.bf16.mxu0 0
  %596 = vmatmul.mubr.bf16.gmra.mrb[0].mxu0 %v491
  %v597 = vpop.f32.mrb[0].mxu0
  %v598 = vadd.f32 %v513, %v597
  %v599 = vpop.f32.mrb[0].mxu0
  %v600 = vpop.f32.mrb[0].mxu0
  %v601 = vpop.f32.mrb[0].mxu0
  %602 = vdwg.mxu0
  %603 = vst [vmem:[%s11] sm:$0xff] %v598
  // Predicated region
  $region46: #{net_forward.1} parent=0 // pred_check
    _
  $region47: #{net_forward.1} parent=0 // pred_check_branch
    %605 = sbr.rel (0) target = $region49
  $region48: #{net_forward.1} parent=0 // pred_region
    _
  $region49: #{net_forward.1} parent=0 // pred_fallthru
    _
  // Predicated region
  $region50: #{net_forward.1} parent=0 // pred_check
    _
  $region51: #{net_forward.1} parent=0 // pred_check_branch
    %607 = sbr.rel (0) target = $region53
  $region52: #{net_forward.1} parent=0 // pred_region
    _
  $region53: #{net_forward.1} parent=0 // pred_fallthru
    _

</llo_original>
